<compile_context>
chip_gen: v7x
topology: tpu7x:2x2x1
jax: 0.10.0
libtpu: 0.0.40
codegen_flags: <defaults>
</compile_context>

<pallas_src>
import math
import functools

import jax
import jax.numpy as jnp
from jax.experimental import pallas as pl
from jax.experimental.pallas import tpu as pltpu


# ---------------------------------------------------------------------------
# helpers
# ---------------------------------------------------------------------------
def _round_up(v, m):
    return (v + m - 1) // m * m


def _pad2d(a, rows, cols):
    pr = rows - a.shape[0]
    pc = cols - a.shape[1]
    if pr or pc:
        a = jnp.pad(a, ((0, pr), (0, pc)))
    return a


def _apply_activation(y, activation):
    if activation == 1:        # relu
        return jnp.maximum(y, 0.0)
    if activation == 2:        # sigmoid
        return jax.nn.sigmoid(y)
    return y                   # none


# ---------------------------------------------------------------------------
# Per-layer K-tiled GEMM + bias + activation (for large layers)
# ---------------------------------------------------------------------------
def _make_linear_kernel(activation, use_bias, compute_dtype):
    def kernel(*refs):
        if use_bias:
            x_ref, w_ref, b_ref, o_ref, acc_ref = refs
        else:
            x_ref, w_ref, o_ref, acc_ref = refs
            b_ref = None

        k = pl.program_id(2)

        @pl.when(k == 0)
        def _():
            acc_ref[...] = jnp.zeros_like(acc_ref)

        xv = x_ref[...]
        wv = w_ref[...]
        if compute_dtype is not None:
            xv = xv.astype(compute_dtype)
            wv = wv.astype(compute_dtype)
        acc_ref[...] += jnp.dot(xv, wv, preferred_element_type=jnp.float32)

        @pl.when(k == pl.num_programs(2) - 1)
        def _():
            y = acc_ref[...]
            if use_bias:
                y = y + b_ref[...].astype(jnp.float32)   # (1, tn) broadcast
            y = _apply_activation(y, activation)
            o_ref[...] = y.astype(o_ref.dtype)

    return kernel


def fused_linear(x, w_kn, b=None, *, activation=1,
                 tm=512, tn=512, tk=512, compute_dtype=None):
    """y = act(x @ w_kn + b), K-tiled, f32 accumulation. w_kn is (K, N)."""
    M, K = x.shape
    K2, N = w_kn.shape
    assert K == K2, (K, K2)
    use_bias = b is not None

    # 8/128-aligned tiles clamped to the (padded) problem size.
    tm = min(tm, _round_up(M, 8))
    tn = min(tn, _round_up(N, 128))
    tk = min(tk, _round_up(K, 128))
    Mp, Np, Kp = _round_up(M, tm), _round_up(N, tn), _round_up(K, tk)

    xp = _pad2d(x, Mp, Kp)                       # zero K-padding -> acc += 0
    wp = _pad2d(w_kn, Kp, Np)

    args = [xp, wp]
    in_specs = [
        pl.BlockSpec((tm, tk), lambda i, j, k: (i, k)),
        pl.BlockSpec((tk, tn), lambda i, j, k: (k, j)),
    ]
    if use_bias:
        bp = _pad2d(b.reshape(1, N), 1, Np)
        args.append(bp)
        in_specs.append(pl.BlockSpec((1, tn), lambda i, j, k: (0, j)))

    out_dtype = x.dtype
    in_item = xp.dtype.itemsize
    out_item = jnp.dtype(out_dtype).itemsize
    grid = (Mp // tm, Np // tn, Kp // tk)

    # VMEM budget estimate (double-buffered inputs + output + f32 acc).
    vmem_est = (2 * (tm * tk + tk * tn) * in_item
                + (2 * tn * in_item if use_bias else 0)
                + 2 * tm * tn * out_item
                + tm * tn * 4)
    vmem_limit = int(min(max(2 * vmem_est, 16 * 2 ** 20), 40 * 2 ** 20))

    cost = pl.CostEstimate(
        flops=2 * Mp * Np * Kp,
        transcendentals=(Mp * Np if activation == 2 else 0),
        bytes_accessed=int(xp.nbytes + wp.nbytes
                           + (bp.nbytes if use_bias else 0)
                           + Mp * Np * out_item),
    )

    kernel = _make_linear_kernel(activation, use_bias, compute_dtype)
    out = pl.pallas_call(
        kernel,
        out_shape=jax.ShapeDtypeStruct((Mp, Np), out_dtype),
        grid=grid,
        in_specs=in_specs,
        out_specs=pl.BlockSpec((tm, tn), lambda i, j, k: (i, j)),
        scratch_shapes=[pltpu.VMEM((tm, tn), jnp.float32)],
        compiler_params=pltpu.CompilerParams(
            dimension_semantics=("parallel", "parallel", "arbitrary"),
            vmem_limit_bytes=vmem_limit,
        ),
        cost_estimate=cost,
    )(*args)
    return out[:M, :N]


# ---------------------------------------------------------------------------
# Whole-MLP fusion for small networks (all weights resident in VMEM)
# ---------------------------------------------------------------------------
def _make_fused_mlp_kernel(num_layers, activation, use_bias, compute_dtype):
    def kernel(x_ref, *refs):
        o_ref = refs[-1]
        params = refs[:-1]
        h = x_ref[...]
        if compute_dtype is not None:
            h = h.astype(compute_dtype)
        idx = 0
        for _ in range(num_layers):
            w = params[idx][...]
            idx += 1
            if compute_dtype is not None:
                w = w.astype(compute_dtype)
            y = jnp.dot(h, w, preferred_element_type=jnp.float32)
            if use_bias:
                y = y + params[idx][...].astype(jnp.float32)
                idx += 1
            y = _apply_activation(y, activation)
            h = y.astype(compute_dtype) if compute_dtype is not None else y
        o_ref[...] = h.astype(o_ref.dtype)

    return kernel


def fused_mlp(x, weights_kn, biases=None, *, activation=1,
              tm=512, compute_dtype=None):
    """All layers in one pallas_call; tiles over batch only."""
    M, K0 = x.shape
    num_layers = len(weights_kn)
    use_bias = biases is not None and len(biases) > 0
    n_out = weights_kn[-1].shape[1]

    tm = min(tm, _round_up(M, 8))
    Mp = _round_up(M, tm)
    xp = _pad2d(x, Mp, K0)

    args = [xp]
    in_specs = [pl.BlockSpec((tm, K0), lambda i: (i, 0))]
    param_bytes = 0
    for li in range(num_layers):
        w = weights_kn[li]
        args.append(w)
        in_specs.append(pl.BlockSpec(w.shape, lambda i: (0, 0)))
        param_bytes += w.nbytes
        if use_bias:
            b2 = biases[li].reshape(1, -1)
            args.append(b2)
            in_specs.append(pl.BlockSpec(b2.shape, lambda i: (0, 0)))
            param_bytes += b2.nbytes

    flops = sum(2 * Mp * w.shape[0] * w.shape[1] for w in weights_kn)
    trans = (sum(Mp * w.shape[1] for w in weights_kn) if activation == 2 else 0)
    cost = pl.CostEstimate(
        flops=int(flops), transcendentals=int(trans),
        bytes_accessed=int(xp.nbytes + param_bytes
                           + Mp * n_out * jnp.dtype(x.dtype).itemsize),
    )

    kernel = _make_fused_mlp_kernel(num_layers, activation, use_bias,
                                    compute_dtype)
    out = pl.pallas_call(
        kernel,
        out_shape=jax.ShapeDtypeStruct((Mp, n_out), x.dtype),
        grid=(Mp // tm,),
        in_specs=in_specs,
        out_specs=pl.BlockSpec((tm, n_out), lambda i: (i, 0)),
        compiler_params=pltpu.CompilerParams(
            dimension_semantics=("parallel",),
            vmem_limit_bytes=32 * 2 ** 20,
        ),
        cost_estimate=cost,
    )(*args)
    return out[:M]


# ---------------------------------------------------------------------------
# Module
# ---------------------------------------------------------------------------
class MLP:
    """JAX/Pallas port of apex.mlp.MLP (forward only)."""

    def __init__(self, mlp_sizes, bias=True, activation="relu", key=None,
                 compute_dtype=None, fuse_layers=None,
                 tile_m=512, tile_n=512, tile_k=512):
        self.mlp_sizes = list(mlp_sizes)
        self.num_layers = len(mlp_sizes) - 1
        self.bias = 1 if bias else 0
        if activation == "none":
            self.activation = 0
        elif activation == "relu":
            self.activation = 1
        elif activation == "sigmoid":
            self.activation = 2
        else:
            raise TypeError("activation must be relu or none.")
        self.compute_dtype = compute_dtype
        self.fuse_layers = fuse_layers
        self.tile_m, self.tile_n, self.tile_k = tile_m, tile_n, tile_k

        key = jax.random.PRNGKey(0) if key is None else key
        self.weights = []   # stored pre-transposed: (in_features, out_features)
        self.biases = []
        for i in range(self.num_layers):
            key, kw, kb = jax.random.split(key, 3)
            in_f, out_f = mlp_sizes[i], mlp_sizes[i + 1]
            # matches reset_parameters(): normal(0, sqrt(2/(fan_in+fan_out)))
            w_std = math.sqrt(2.0 / float(out_f + in_f))
            self.weights.append(
                jax.random.normal(kw, (in_f, out_f), jnp.float32) * w_std)
            if self.bias:
                b_std = math.sqrt(1.0 / float(out_f))
                self.biases.append(
                    jax.random.normal(kb, (out_f,), jnp.float32) * b_std)

    def __call__(self, x):
        fuse = self.fuse_layers
        if fuse is None:
            param_bytes = sum(int(w.nbytes) for w in self.weights) + \
                          sum(int(b.nbytes) for b in self.biases)
            fuse = (param_bytes <= 4 * 2 ** 20) and max(self.mlp_sizes) <= 2048

        if fuse:
            return fused_mlp(
                x, self.weights, self.biases if self.bias else None,
                activation=self.activation, tm=self.tile_m,
                compute_dtype=self.compute_dtype)

        h = x
        for i in range(self.num_layers):
            b = self.biases[i] if self.bias else None
            h = fused_linear(
                h, self.weights[i], b, activation=self.activation,
                tm=self.tile_m, tn=self.tile_n, tk=self.tile_k,
                compute_dtype=self.compute_dtype)
        return h

    def reference(self, x):
        """Pure-JAX reference for correctness checking (always f32)."""
        h = x.astype(jnp.float32)
        for i in range(self.num_layers):
            h = jnp.dot(h, self.weights[i].astype(jnp.float32),
                        precision=jax.lax.Precision.HIGHEST)
            if self.bias:
                h = h + self.biases[i].astype(jnp.float32)
            h = _apply_activation(h, self.activation)
        return h


# ---------------------------------------------------------------------------
# Self-test
# ---------------------------------------------------------------------------
if __name__ == "__main__":
    # --- Test A: toy shapes, bias + relu, whole-MLP fused path ---------------
    model_a = MLP([32, 64, 48], bias=True, activation="relu",
                  key=jax.random.PRNGKey(0))
    x_a = jax.random.normal(jax.random.PRNGKey(1), (8, 32), jnp.float32)
    out_a = jax.block_until_ready(model_a(x_a))
    ref_a = model_a.reference(x_a)
    assert out_a.shape == (8, 48)
    assert jnp.allclose(out_a, ref_a, atol=2e-3, rtol=2e-3), "A mismatch"

    # --- Test B: forced K-tiled per-layer path (padding + K accumulation) ----
    model_b = MLP([384, 256, 128], bias=True, activation="relu",
                  key=jax.random.PRNGKey(2), fuse_layers=False,
                  tile_m=256, tile_n=256, tile_k=256)
    x_b = jax.random.normal(jax.random.PRNGKey(3), (320, 384), jnp.float32)
    out_b = jax.block_until_ready(model_b(x_b))
    ref_b = model_b.reference(x_b)
    assert out_b.shape == (320, 128)
    assert jnp.allclose(out_b, ref_b, atol=2e-3, rtol=2e-3), "B mismatch"

    # --- Test C: no-bias + sigmoid, tiled path (exercises bias-free kernel) --
    model_c = MLP([64, 96, 32], bias=False, activation="sigmoid",
                  key=jax.random.PRNGKey(4), fuse_layers=False)
    x_c = jax.random.normal(jax.random.PRNGKey(5), (16, 64), jnp.float32)
    out_c = jax.block_until_ready(model_c(x_c))
    ref_c = model_c.reference(x_c)
    assert out_c.shape == (16, 32)
    assert jnp.allclose(out_c, ref_c, atol=2e-3, rtol=2e-3), "C mismatch"

    # --- Test D: bf16 MXU inputs (f32 accumulation), loose tolerance ---------
    model_d = MLP([384, 256, 128], bias=True, activation="relu",
                  key=jax.random.PRNGKey(2), fuse_layers=False,
                  compute_dtype=jnp.bfloat16,
                  tile_m=256, tile_n=256, tile_k=256)
    out_d = jax.block_until_ready(model_d(x_b))
    ref_d = model_d.reference(x_b)
    assert jnp.allclose(out_d, ref_d, atol=1e-1, rtol=1e-1), "D mismatch"

    print("KERNEL_OK")
</pallas_src>

<mosaic_0001>
module attributes {stable_mosaic.version = 11 : i64} {
  func.func @kernel(%arg0: i32, %arg1: memref<8x32xf32, #tpu.memory_space<vmem>>, %arg2: memref<32x64xf32, #tpu.memory_space<vmem>>, %arg3: memref<1x64xf32, #tpu.memory_space<vmem>>, %arg4: memref<64x48xf32, #tpu.memory_space<vmem>>, %arg5: memref<1x48xf32, #tpu.memory_space<vmem>>, %arg6: memref<8x48xf32, #tpu.memory_space<vmem>>) attributes {dimension_semantics = [#tpu.dimension_semantics<parallel>], iteration_bounds = array<i64: 1>, scalar_prefetch = 0 : i64, scratch_operands = 0 : i64, tpu.core_type = #tpu.core_type<tc>, window_params = [{transform_indices = @transform_0, window_bounds = array<i64: 8, 32>}, {pipeline_mode = #tpu.pipeline_mode<synchronous>, transform_indices = @transform_1, window_bounds = array<i64: 32, 64>}, {pipeline_mode = #tpu.pipeline_mode<synchronous>, transform_indices = @transform_2, window_bounds = array<i64: 1, 64>}, {pipeline_mode = #tpu.pipeline_mode<synchronous>, transform_indices = @transform_3, window_bounds = array<i64: 64, 48>}, {pipeline_mode = #tpu.pipeline_mode<synchronous>, transform_indices = @transform_4, window_bounds = array<i64: 1, 48>}, {transform_indices = @transform_5, window_bounds = array<i64: 8, 48>}]} {
    %c0 = arith.constant 0 : index
    %c0_0 = arith.constant 0 : index
    %0 = vector.load %arg1[%c0, %c0_0] : memref<8x32xf32, #tpu.memory_space<vmem>>, vector<8x32xf32>
    %c0_1 = arith.constant 0 : index
    %c0_2 = arith.constant 0 : index
    %1 = vector.load %arg2[%c0_1, %c0_2] : memref<32x64xf32, #tpu.memory_space<vmem>>, vector<32x64xf32>
    %cst = arith.constant dense<0.000000e+00> : vector<8x64xf32>
    %2 = tpu.matmul %0, %1, %cst {dimension_numbers = #tpu.dot_dimension_numbers<[1], [0], [0], [1], [0, 0, 1, 1], [], []>} : vector<8x32xf32>, vector<32x64xf32>, vector<8x64xf32> -> vector<8x64xf32>
    %c0_3 = arith.constant 0 : index
    %c0_4 = arith.constant 0 : index
    %3 = vector.load %arg3[%c0_3, %c0_4] : memref<1x64xf32, #tpu.memory_space<vmem>>, vector<1x64xf32>
    %4 = vector.broadcast %3 : vector<1x64xf32> to vector<8x64xf32>
    %5 = arith.addf %2, %4 : vector<8x64xf32>
    %cst_5 = arith.constant 0.000000e+00 : f32
    %6 = vector.broadcast %cst_5 : f32 to vector<8x64xf32>
    %7 = arith.maximumf %5, %6 : vector<8x64xf32>
    %c0_6 = arith.constant 0 : index
    %c0_7 = arith.constant 0 : index
    %8 = vector.load %arg4[%c0_6, %c0_7] : memref<64x48xf32, #tpu.memory_space<vmem>>, vector<64x48xf32>
    %cst_8 = arith.constant dense<0.000000e+00> : vector<8x48xf32>
    %9 = tpu.matmul %7, %8, %cst_8 {dimension_numbers = #tpu.dot_dimension_numbers<[1], [0], [0], [1], [0, 0, 1, 1], [], []>} : vector<8x64xf32>, vector<64x48xf32>, vector<8x48xf32> -> vector<8x48xf32>
    %c0_9 = arith.constant 0 : index
    %c0_10 = arith.constant 0 : index
    %10 = vector.load %arg5[%c0_9, %c0_10] : memref<1x48xf32, #tpu.memory_space<vmem>>, vector<1x48xf32>
    %11 = vector.broadcast %10 : vector<1x48xf32> to vector<8x48xf32>
    %12 = arith.addf %9, %11 : vector<8x48xf32>
    %cst_11 = arith.constant 0.000000e+00 : f32
    %13 = vector.broadcast %cst_11 : f32 to vector<8x48xf32>
    %14 = arith.maximumf %12, %13 : vector<8x48xf32>
    %c0_12 = arith.constant 0 : index
    %c0_13 = arith.constant 0 : index
    %15 = vector.load %arg6[%c0_12, %c0_13] : memref<8x48xf32, #tpu.memory_space<vmem>>, vector<8x48xf32>
    tpu.vector_store %arg6[%c0_12, %c0_13], %14 {strides = array<i32>} : memref<8x48xf32, #tpu.memory_space<vmem>>, vector<8x48xf32>,
    return
  }
  func.func @transform_0(%arg0: i32) -> (i32, i32) {
    %c0_i32 = arith.constant 0 : i32
    %c0_i32_0 = arith.constant 0 : i32
    return %arg0, %c0_i32 : i32, i32
  }
  func.func @transform_1(%arg0: i32) -> (i32, i32) {
    %c0_i32 = arith.constant 0 : i32
    %c0_i32_0 = arith.constant 0 : i32
    %c0_i32_1 = arith.constant 0 : i32
    return %c0_i32, %c0_i32_0 : i32, i32
  }
  func.func @transform_2(%arg0: i32) -> (i32, i32) {
    %c0_i32 = arith.constant 0 : i32
    %c0_i32_0 = arith.constant 0 : i32
    %c0_i32_1 = arith.constant 0 : i32
    return %c0_i32, %c0_i32_0 : i32, i32
  }
  func.func @transform_3(%arg0: i32) -> (i32, i32) {
    %c0_i32 = arith.constant 0 : i32
    %c0_i32_0 = arith.constant 0 : i32
    %c0_i32_1 = arith.constant 0 : i32
    return %c0_i32, %c0_i32_0 : i32, i32
  }
  func.func @transform_4(%arg0: i32) -> (i32, i32) {
    %c0_i32 = arith.constant 0 : i32
    %c0_i32_0 = arith.constant 0 : i32
    %c0_i32_1 = arith.constant 0 : i32
    return %c0_i32, %c0_i32_0 : i32, i32
  }
  func.func @transform_5(%arg0: i32) -> (i32, i32) {
    %c0_i32 = arith.constant 0 : i32
    %c0_i32_0 = arith.constant 0 : i32
    return %arg0, %c0_i32 : i32, i32
  }
}

</mosaic_0001>

<llo_original>
// kernel: tpu_custom_call.1
$region0: #{tpu_custom_call.1}
  #allocation0 [shape = 'u32[]', space=smem, size = 0x4, offset = 0x4, fixed_abs, tag = 'smem constant byte address 0x4 - core index']
  #allocation1 [shape = 'u32[144,128]{1,0:T(1,128)}', space=vmem, size = 0x12000, scoped, tag = 'internal scratch']
  %s0 = inlined_call_operand.vmem [shape: f32[8,32], index: 0, kind: input, shape index: {}]
  %s1 = inlined_call_operand.vmem [shape: f32[32,64], index: 1, kind: input, shape index: {}]
  %s2 = inlined_call_operand.vmem [shape: f32[1,64], index: 2, kind: input, shape index: {}]
  %s3 = inlined_call_operand.vmem [shape: f32[64,48], index: 3, kind: input, shape index: {}]
  %s4 = inlined_call_operand.vmem [shape: f32[1,48], index: 4, kind: input, shape index: {}]
  %s5 = inlined_call_operand.hbm [shape: f32[8,48], index: 5, kind: output, shape index: {}]
  %s6 = sld [smem:[#allocation0]]
  $region30: #{tpu_custom_call.1} parent=0
    _
  %s8 = ssub.s32 1, %s6
  %s9 = scalar_select 0, %s8, %s6
  $region1: #{tpu_custom_call.1} parent=0
    #allocation2 [shape = 'u8[4096]{0}', space=vmem, size = 0x1000, scoped, tag = 'output window, operand 0, single buffered']
    #allocation3 [shape = 's32[1]{0}', space=sflag, size = 0x4, scoped, tag = 'scoped memory for tpu_custom_call.1']
    %10 = vsyncpa [#allocation3], 0
    // Predicated region
    $region2: #{tpu_custom_call.1} parent=1 // pred_check
      _
    $region3: #{tpu_custom_call.1} parent=1 // pred_check_branch
      %12 = sbr.rel (0) target = $region5
    $region4: #{tpu_custom_call.1} parent=1 // pred_region
      _
    $region5: #{tpu_custom_call.1} parent=1 // pred_fallthru
      _
    // Predicated region
    $region6: #{tpu_custom_call.1} parent=1 // pred_check
      _
    $region7: #{tpu_custom_call.1} parent=1 // pred_check_branch
      %14 = sbr.rel (0) target = $region9
    $region8: #{tpu_custom_call.1} parent=1 // pred_region
      _
    $region9: #{tpu_custom_call.1} parent=1 // pred_fallthru
      _
    // Predicated region
    $region10: #{tpu_custom_call.1} parent=1 // pred_check
      _
    $region11: #{tpu_custom_call.1} parent=1 // pred_check_branch
      %16 = sbr.rel (0) target = $region13
    $region12: #{tpu_custom_call.1} parent=1 // pred_region
      _
    $region13: #{tpu_custom_call.1} parent=1 // pred_fallthru
      _
    // Predicated region
    $region14: #{tpu_custom_call.1} parent=1 // pred_check
      _
    $region15: #{tpu_custom_call.1} parent=1 // pred_check_branch
      %18 = sbr.rel (0) target = $region17
    $region16: #{tpu_custom_call.1} parent=1 // pred_region
      _
    $region17: #{tpu_custom_call.1} parent=1 // pred_fallthru
      _
    // Predicated region
    $region18: #{tpu_custom_call.1} parent=1 // pred_check
      _
    $region19: #{tpu_custom_call.1} parent=1 // pred_check_branch
      %20 = sbr.rel (0) target = $region21
    $region20: #{tpu_custom_call.1} parent=1 // pred_region
      _
    $region21: #{tpu_custom_call.1} parent=1 // pred_fallthru
      _
    %v21 = vld [vmem:[%s0] sm:$0xff]
    %v22 = vld [vmem:[%s1] sm:$0xff]
    %v23 = vld [vmem:[%s1 + $0x8] sm:$0xff]
    %v24 = vld [vmem:[%s1 + $0x10] sm:$0xff]
    %v25 = vld [vmem:[%s1 + $0x18] sm:$0xff]
    %v26 = vld [vmem:[%s2] sm:$0x1]
    %v28 = vlaneseq
    %v29 = vshrl.u32 %v28, 7
    %v30 = vsub.s32 0, %v29
    %v31 = vrot.slane %v26, %v30
    %vm33 = vcmask 261120
    %v35 = vsel %vm33, %v21, 0
    %37 = vmatprep.subr.mxu0 0.0
    %38 = vmatpush1.msra.mxu0 %v22
    %39 = vmatprep.subr.mxu0 0.0
    %40 = vmatpush1.msra.mxu0 %v23
    %41 = vmatprep.subr.mxu0 0.0
    %42 = vmatpush1.msra.mxu0 %v24
    %43 = vmatprep.subr.mxu0 0.0
    %44 = vmatpush1.msra.mxu0 %v25
    %45 = vmatprep.subr.mxu0 0.0
    %46 = vmatpush1.msra.mxu0 0.0
    %47 = vmatprep.subr.mxu0 0.0
    %48 = vmatpush1.msra.mxu0 0.0
    %49 = vmatprep.subr.mxu0 0.0
    %50 = vmatpush1.msra.mxu0 0.0
    %51 = vmatprep.subr.mxu0 0.0
    %52 = vmatpush1.msra.mxu0 0.0
    %53 = vmatprep.subr.mxu0 0.0
    %54 = vmatpush1.msra.mxu0 0.0
    %55 = vmatprep.subr.mxu0 0.0
    %56 = vmatpush1.msra.mxu0 0.0
    %57 = vmatprep.subr.mxu0 0.0
    %58 = vmatpush1.msra.mxu0 0.0
    %59 = vmatprep.subr.mxu0 0.0
    %60 = vmatpush1.msra.mxu0 0.0
    %61 = vmatprep.subr.mxu0 0.0
    %62 = vmatpush1.msra.mxu0 0.0
    %63 = vmatprep.subr.mxu0 0.0
    %64 = vmatpush1.msra.mxu0 0.0
    %65 = vmatprep.subr.mxu0 0.0
    %66 = vmatpush1.msra.mxu0 0.0
    %67 = vmatprep.subr.mxu0 0.0
    %68 = vmatpush1.msra.mxu0 0.0
    %69 = vmatprep.subr.mxu0 0.0
    %70 = vmatpush1.msra.mxu0 0.0
    %71 = vmatprep.subr.mxu0 0.0
    %72 = vmatpush1.msra.mxu0 0.0
    %73 = vmatprep.subr.mxu0 0.0
    %74 = vmatpush1.msra.mxu0 0.0
    %75 = vmatprep.subr.mxu0 0.0
    %76 = vmatpush1.msra.mxu0 0.0
    %77 = vmatprep.subr.mxu0 0.0
    %78 = vmatpush1.msra.mxu0 0.0
    %79 = vmatprep.subr.mxu0 0.0
    %80 = vmatpush1.msra.mxu0 0.0
    %81 = vmatprep.subr.mxu0 0.0
    %82 = vmatpush1.msra.mxu0 0.0
    %83 = vmatprep.subr.mxu0 0.0
    %84 = vmatpush1.msra.mxu0 0.0
    %85 = vmatprep.subr.mxu0 0.0
    %86 = vmatpush1.msra.mxu0 0.0
    %87 = vmatprep.subr.mxu0 0.0
    %88 = vmatpush1.msra.mxu0 0.0
    %89 = vmatprep.subr.mxu0 0.0
    %90 = vmatpush1.msra.mxu0 0.0
    %91 = vmatprep.subr.mxu0 0.0
    %92 = vmatpush1.msra.mxu0 0.0
    %93 = vmatprep.subr.mxu0 0.0
    %94 = vmatpush1.msra.mxu0 0.0
    %95 = vmatprep.subr.mxu0 0.0
    %96 = vmatpush1.msra.mxu0 0.0
    %97 = vmatprep.subr.mxu0 0.0
    %98 = vmatpush1.msra.mxu0 0.0
    %99 = vmatprep.subr.mxu0 0.0
    %100 = vmatpush1.msra.mxu0 0.0
    %101 = vmatprep.mubr.f32.mxu0 0.0
    %102 = vmatmul.mubr.f32.gmra.mrb[0].mxu0 %v35
    %v103 = vpop.f32.mrb[0].mxu0
    %v104 = vadd.f32 %v31, %v103
    %v105 = vpop.f32.mrb[0].mxu0
    %106 = vdwg.mxu0
    %v107 = vmax.f32 %v104, 0.0
    %v108 = vld [vmem:[%s3] sm:$0xff]
    %v109 = vld [vmem:[%s3 + $0x8] sm:$0xff]
    %v110 = vld [vmem:[%s3 + $0x10] sm:$0xff]
    %v111 = vld [vmem:[%s3 + $0x18] sm:$0xff]
    %v112 = vld [vmem:[%s3 + $0x20] sm:$0xff]
    %v113 = vld [vmem:[%s3 + $0x28] sm:$0xff]
    %v114 = vld [vmem:[%s3 + $0x30] sm:$0xff]
    %v115 = vld [vmem:[%s3 + $0x38] sm:$0xff]
    %v116 = vld [vmem:[%s4] sm:$0x1]
    %v118 = vlaneseq
    %v119 = vshrl.u32 %v118, 7
    %v120 = vsub.s32 0, %v119
    %v121 = vrot.slane %v116, %v120
    %vm123 = vcmask 523264
    %v125 = vsel %vm123, %v107, 0
    %127 = vmatprep.subr.mxu0 0.0
    %128 = vmatpush1.msra.mxu0 %v108
    %129 = vmatprep.subr.mxu0 0.0
    %130 = vmatpush1.msra.mxu0 %v109
    %131 = vmatprep.subr.mxu0 0.0
    %132 = vmatpush1.msra.mxu0 %v110
    %133 = vmatprep.subr.mxu0 0.0
    %134 = vmatpush1.msra.mxu0 %v111
    %135 = vmatprep.subr.mxu0 0.0
    %136 = vmatpush1.msra.mxu0 %v112
    %137 = vmatprep.subr.mxu0 0.0
    %138 = vmatpush1.msra.mxu0 %v113
    %139 = vmatprep.subr.mxu0 0.0
    %140 = vmatpush1.msra.mxu0 %v114
    %141 = vmatprep.subr.mxu0 0.0
    %142 = vmatpush1.msra.mxu0 %v115
    %143 = vmatprep.subr.mxu0 0.0
    %144 = vmatpush1.msra.mxu0 0.0
    %145 = vmatprep.subr.mxu0 0.0
    %146 = vmatpush1.msra.mxu0 0.0
    %147 = vmatprep.subr.mxu0 0.0
    %148 = vmatpush1.msra.mxu0 0.0
    %149 = vmatprep.subr.mxu0 0.0
    %150 = vmatpush1.msra.mxu0 0.0
    %151 = vmatprep.subr.mxu0 0.0
    %152 = vmatpush1.msra.mxu0 0.0
    %153 = vmatprep.subr.mxu0 0.0
    %154 = vmatpush1.msra.mxu0 0.0
    %155 = vmatprep.subr.mxu0 0.0
    %156 = vmatpush1.msra.mxu0 0.0
    %157 = vmatprep.subr.mxu0 0.0
    %158 = vmatpush1.msra.mxu0 0.0
    %159 = vmatprep.subr.mxu0 0.0
    %160 = vmatpush1.msra.mxu0 0.0
    %161 = vmatprep.subr.mxu0 0.0
    %162 = vmatpush1.msra.mxu0 0.0
    %163 = vmatprep.subr.mxu0 0.0
    %164 = vmatpush1.msra.mxu0 0.0
    %165 = vmatprep.subr.mxu0 0.0
    %166 = vmatpush1.msra.mxu0 0.0
    %167 = vmatprep.subr.mxu0 0.0
    %168 = vmatpush1.msra.mxu0 0.0
    %169 = vmatprep.subr.mxu0 0.0
    %170 = vmatpush1.msra.mxu0 0.0
    %171 = vmatprep.subr.mxu0 0.0
    %172 = vmatpush1.msra.mxu0 0.0
    %173 = vmatprep.subr.mxu0 0.0
    %174 = vmatpush1.msra.mxu0 0.0
    %175 = vmatprep.subr.mxu0 0.0
    %176 = vmatpush1.msra.mxu0 0.0
    %177 = vmatprep.subr.mxu0 0.0
    %178 = vmatpush1.msra.mxu0 0.0
    %179 = vmatprep.subr.mxu0 0.0
    %180 = vmatpush1.msra.mxu0 0.0
    %181 = vmatprep.subr.mxu0 0.0
    %182 = vmatpush1.msra.mxu0 0.0
    %183 = vmatprep.subr.mxu0 0.0
    %184 = vmatpush1.msra.mxu0 0.0
    %185 = vmatprep.subr.mxu0 0.0
    %186 = vmatpush1.msra.mxu0 0.0
    %187 = vmatprep.subr.mxu0 0.0
    %188 = vmatpush1.msra.mxu0 0.0
    %189 = vmatprep.subr.mxu0 0.0
    %190 = vmatpush1.msra.mxu0 0.0
    %191 = vmatprep.mubr.f32.mxu0 0.0
    %192 = vmatmul.mubr.f32.gmra.mrb[0].mxu0 %v125
    %v193 = vpop.f32.mrb[0].mxu0
    %v194 = vadd.f32 %v121, %v193
    %v195 = vpop.f32.mrb[0].mxu0
    %196 = vdwg.mxu0
    %v197 = vmax.f32 %v194, 0.0
    %vm198 = vcmask 392192
    %199 = vst.msk [vmem:[#allocation2] sm:$0xff] %vm198, %v197
    // Predicated region
    $region22: #{tpu_custom_call.1} parent=1 // pred_check
      _
    $region23: #{tpu_custom_call.1} parent=1 // pred_check_branch
      %201 = sbr.rel (0) target = $region25
    $region24: #{tpu_custom_call.1} parent=1 // pred_region
      %s203 = ssub.s32 128, 128
      %204 = vsyncadd [#allocation3], %s203
      %s206 = sshll.u32 [#allocation2], 4
      %s207 = int_to_ptr.vmem [resolvable:$true] %s206
      %209 = dma.vmem_to_hbm [thread:$0]  %s207, 128, %s5, [#allocation3]
    $region25: #{tpu_custom_call.1} parent=1 // pred_fallthru
      _
    // Predicated region
    $region26: #{tpu_custom_call.1} parent=1 // pred_check
      _
    $region27: #{tpu_custom_call.1} parent=1 // pred_check_branch
      %211 = sbr.rel (0) target = $region29
    $region28: #{tpu_custom_call.1} parent=1 // pred_region
      %212 = dma.done [#allocation3], 128
    $region29: #{tpu_custom_call.1} parent=1 // pred_fallthru
      _
    %213 = vsyncpa [#allocation3], 1

</llo_original>
